<compile_context>
chip_gen: v5e
topology: v5e:2x2
jax: 0.10.0
libtpu: 0.0.40
codegen_flags: <defaults>
</compile_context>

<pallas_src>
import functools

import jax
import jax.numpy as jnp
from jax.experimental import pallas as pl
from jax.experimental.pallas import tpu as pltpu

_MiB = 1024 * 1024


def _mlm_acc_kernel(logits_ref, side_ref, out_ref, *, tile, n_rows):
    logits = logits_ref[...]                        # (tile, V), input dtype
    side = side_ref[...]                            # (tile, 2), f32: [label, mask]
    labels = side[:, 0:1]                           # (tile, 1) f32 (exact ints)
    mask = side[:, 1:2]                             # (tile, 1) f32

    # Neutralize out-of-range rows of the (possibly partial) last logits block:
    # those rows read unspecified VMEM, so gate them explicitly.
    row = (pl.program_id(0) * tile
           + jax.lax.broadcasted_iota(jnp.int32, (tile, 1), 0))
    mask = jnp.where(row < n_rows, mask, 0.0)

    # argmax over the vocab (lane) axis, like torch.argmax(logits, dim=-1).
    # Labels/preds are small integers, exactly representable in f32.
    # TODO(synk): on v7x with bf16 logits, audit the argmax lowering; if the
    # VALU slot saturates, switch to a two-pass row-max / label-hits-max form.
    pred = jnp.argmax(logits, axis=-1, keepdims=True).astype(jnp.float32)
    corr = (pred == labels).astype(jnp.float32)     # (tile, 1)

    # Per-tile partials only; the tiny cross-tile reduce + divide happen in the
    # wrapper, so the grid carries no state (fully parallel / megacore-shardable).
    psum = jnp.sum(mask * corr, axis=0, keepdims=True)                     # (1, 1)
    pcnt = jnp.sum((mask > 0).astype(jnp.float32), axis=0, keepdims=True)  # (1, 1)
    out_ref[...] = jnp.concatenate([psum, pcnt], axis=1).reshape(1, 1, 2)


def _vmem_capacity_bytes():
    """Per-TensorCore VMEM capacity; conservative fallback if the query fails."""
    try:
        info = pltpu.get_tpu_info()
        cap = getattr(info, "vmem_capacity_bytes", None)
        if cap:
            return int(cap)
    except Exception:
        pass
    return 64 * _MiB            # v7x per-core size (smallest of v5e/v6e/v7x)


def _choose_tile(n_rows, vocab, itemsize, budget_bytes, min_tiles=2):
    """Largest row tile whose double-buffered (tile, V) logits block fits the
    budget, capped so the parallel grid has >= min_tiles steps (v7x megacore)."""
    padded_rows = ((n_rows + 7) // 8) * 8
    max_rows = budget_bytes // (2 * vocab * itemsize)      # double-buffered
    tile = max(8, (int(max_rows) // 8) * 8)                # sublane multiple
    if padded_rows >= min_tiles * 8:
        split_cap = max(8, (padded_rows // min_tiles // 8) * 8)
        tile = min(tile, split_cap)
    return max(8, min(tile, padded_rows))


@functools.partial(jax.jit, static_argnames=("vmem_budget_bytes",))
def mlm_accuracy(logits, labels, masked_lm_metric, *,
                 vmem_budget_bytes=64 * _MiB):
    """logits: (..., V) float (bf16 preferred -- streamed in input dtype);
    labels: (...) int; masked_lm_metric: (...) int/float mask or weights."""
    V = logits.shape[-1]
    N = 1
    for d in logits.shape[:-1]:
        N *= d

    logits2 = logits.reshape(N, V)                     # keep input dtype
    labels_f = labels.reshape(N, 1).astype(jnp.float32)
    mask_f = masked_lm_metric.reshape(N, 1).astype(jnp.float32)

    itemsize = jnp.dtype(logits2.dtype).itemsize

    # Generation-aware VMEM ceiling (v7x: 64 MiB/TC, v5e/v6e: 128 MiB).
    capacity = _vmem_capacity_bytes()
    vmem_cap = int(0.7 * capacity)
    budget = max(4 * _MiB, min(int(vmem_budget_bytes), vmem_cap - 4 * _MiB))

    tile = _choose_tile(N, V, itemsize, budget)
    num_tiles = pl.cdiv(N, tile)
    Np = num_tiles * tile

    # Pad only the tiny packed side array; the logits edge block's garbage tail
    # rows are neutralized in-kernel by the row < N predicate (and by mask==0).
    pad = Np - N
    if pad:
        labels_f = jnp.pad(labels_f, ((0, pad), (0, 0)), constant_values=-1.0)
        mask_f = jnp.pad(mask_f, ((0, pad), (0, 0)), constant_values=0.0)
    side = jnp.concatenate([labels_f, mask_f], axis=1)   # (Np, 2) f32

    logits_buf_bytes = 2 * tile * V * itemsize            # double-buffered block
    side_buf_bytes = 2 * tile * 2 * 4
    vmem_limit = int(min(vmem_cap,
                         max(24 * _MiB,
                             logits_buf_bytes + side_buf_bytes + 4 * _MiB)))

    cost = pl.CostEstimate(
        flops=2 * N * V,
        transcendentals=0,
        bytes_accessed=N * V * itemsize + Np * 8 + num_tiles * 8,
    )

    partials = pl.pallas_call(
        functools.partial(_mlm_acc_kernel, tile=tile, n_rows=N),
        out_shape=jax.ShapeDtypeStruct((num_tiles, 1, 2), jnp.float32),
        grid_spec=pltpu.PrefetchScalarGridSpec(
            num_scalar_prefetch=0,
            grid=(num_tiles,),
            in_specs=[
                pl.BlockSpec((tile, V), lambda i: (i, 0)),   # logits row stream
                pl.BlockSpec((tile, 2), lambda i: (i, 0)),   # packed labels+mask
            ],
            out_specs=pl.BlockSpec((1, 1, 2), lambda i: (i, 0, 0)),  # (sum, cnt)
        ),
        compiler_params=pltpu.CompilerParams(
            dimension_semantics=("parallel",),   # no carried state
            vmem_limit_bytes=vmem_limit,
        ),
        cost_estimate=cost,
    )(logits2, side)

    # Final tiny reduce + divide in plain JAX (NaN if no positions are masked,
    # matching the PyTorch reference).
    return jnp.sum(partials[:, 0, 0]) / jnp.sum(partials[:, 0, 1])


def _reference(logits, labels, mask):
    y_pred = jnp.argmax(logits, axis=-1).reshape(-1)
    y_true = labels.reshape(-1)
    m = mask.reshape(-1).astype(jnp.float32)
    corr = (y_pred == y_true).astype(jnp.float32) * m
    return jnp.sum(corr) / jnp.sum((m > 0).astype(jnp.float32))


if __name__ == "__main__":
    key = jax.random.PRNGKey(0)
    k1, k2, k3, k4, k5, k6 = jax.random.split(key, 6)

    # Test 1: f32 logits, tile-aligned rows.
    B, S, V = 2, 8, 32
    logits = jax.random.normal(k1, (B, S, V), dtype=jnp.float32)
    labels = jax.random.randint(k2, (B, S), 0, V, dtype=jnp.int32)
    mask = jax.random.randint(k3, (B, S), 0, 2, dtype=jnp.int32)
    mask = mask.at[0, 0].set(1)    # guarantee at least one masked position

    acc = jax.block_until_ready(mlm_accuracy(logits, labels, mask))
    ref = _reference(logits, labels, mask)
    assert jnp.allclose(acc, ref, atol=1e-6), (acc, ref)

    # Test 2: bf16 logits with a ragged row count (exercises the partial
    # last logits block + in-kernel row-validity predicate).
    B2, S2, V2 = 3, 5, 64
    logits2 = jax.random.normal(k4, (B2, S2, V2), dtype=jnp.bfloat16)
    labels2 = jax.random.randint(k5, (B2, S2), 0, V2, dtype=jnp.int32)
    mask2 = jax.random.randint(k6, (B2, S2), 0, 2, dtype=jnp.int32)
    mask2 = mask2.at[0, 0].set(1)

    acc2 = jax.block_until_ready(mlm_accuracy(logits2, labels2, mask2))
    ref2 = _reference(logits2, labels2, mask2)
    assert jnp.allclose(acc2, ref2, atol=1e-6), (acc2, ref2)

    print("KERNEL_OK")
</pallas_src>

<mosaic_0001>
module attributes {stable_mosaic.version = 11 : i64} {
  func.func @_mlm_acc_kernel(%arg0: i32, %arg1: memref<8x32xf32, #tpu.memory_space<vmem>>, %arg2: memref<8x2xf32, #tpu.memory_space<vmem>>, %arg3: memref<1x1x2xf32, #tpu.memory_space<vmem>>) attributes {dimension_semantics = [#tpu.dimension_semantics<parallel>], iteration_bounds = array<i64: 2>, scalar_prefetch = 0 : i64, scratch_operands = 0 : i64, tpu.core_type = #tpu.core_type<tc>, window_params = [{transform_indices = @transform_0, window_bounds = array<i64: 8, 32>}, {transform_indices = @transform_1, window_bounds = array<i64: 8, 2>}, {transform_indices = @transform_2, window_bounds = array<i64: 1, 1, 2>}]} {
    %c0 = arith.constant 0 : index
    %c0_0 = arith.constant 0 : index
    %0 = vector.load %arg1[%c0, %c0_0] : memref<8x32xf32, #tpu.memory_space<vmem>>, vector<8x32xf32>
    %c0_1 = arith.constant 0 : index
    %c0_2 = arith.constant 0 : index
    %1 = vector.load %arg2[%c0_1, %c0_2] : memref<8x2xf32, #tpu.memory_space<vmem>>, vector<8x2xf32>
    %2 = vector.extract_strided_slice %1 {offsets = [0, 0], sizes = [8, 1], strides = [1, 1]} : vector<8x2xf32> to vector<8x1xf32>
    %3 = vector.extract_strided_slice %1 {offsets = [0, 1], sizes = [8, 1], strides = [1, 1]} : vector<8x2xf32> to vector<8x1xf32>
    %c8_i32 = arith.constant 8 : i32
    %4 = arith.muli %arg0, %c8_i32 : i32
    %5 = tpu.iota {dimensions = array<i32: 0>} : vector<8x1xi32>
    %6 = vector.broadcast %4 : i32 to vector<8x1xi32>
    %7 = arith.addi %6, %5 : vector<8x1xi32>
    %c16_i32 = arith.constant 16 : i32
    %8 = vector.broadcast %c16_i32 : i32 to vector<8x1xi32>
    %9 = arith.cmpi slt, %7, %8 : vector<8x1xi32>
    %cst = arith.constant 0.000000e+00 : f32
    %10 = vector.broadcast %cst : f32 to vector<8x1xf32>
    %11 = arith.select %9, %3, %10 : vector<8x1xi1>, vector<8x1xf32>
    %12 = tpu.reduce_index %0 {axis = 1 : i32, kind = #tpu.reduction_kind<arg_max>} : vector<8x32xf32> -> vector<8xi32>
    %13 = vector.shape_cast %12 : vector<8xi32> to vector<8x1xi32>
    %14 = arith.sitofp %13 : vector<8x1xi32> to vector<8x1xf32>
    %15 = arith.cmpf oeq, %14, %2 : vector<8x1xf32>
    %16 = arith.extui %15 : vector<8x1xi1> to vector<8x1xi32>
    %17 = arith.sitofp %16 : vector<8x1xi32> to vector<8x1xf32>
    %18 = arith.mulf %11, %17 : vector<8x1xf32>
    %cst_3 = arith.constant dense<0.000000e+00> : vector<1xf32>
    %19 = vector.multi_reduction <add>, %18, %cst_3 [0] : vector<8x1xf32> to vector<1xf32>
    %20 = vector.shape_cast %19 : vector<1xf32> to vector<1x1xf32>
    %cst_4 = arith.constant 0.000000e+00 : f32
    %21 = vector.broadcast %cst_4 : f32 to vector<8x1xf32>
    %22 = arith.cmpf ogt, %11, %21 : vector<8x1xf32>
    %23 = arith.extui %22 : vector<8x1xi1> to vector<8x1xi32>
    %24 = arith.sitofp %23 : vector<8x1xi32> to vector<8x1xf32>
    %cst_5 = arith.constant dense<0.000000e+00> : vector<1xf32>
    %25 = vector.multi_reduction <add>, %24, %cst_5 [0] : vector<8x1xf32> to vector<1xf32>
    %26 = vector.shape_cast %25 : vector<1xf32> to vector<1x1xf32>
    %27 = tpu.concatenate %20, %26 in 1 : vector<1x1xf32>, vector<1x1xf32> -> vector<1x2xf32>
    %28 = vector.shape_cast %27 : vector<1x2xf32> to vector<1x1x2xf32>
    %c0_6 = arith.constant 0 : index
    %c0_7 = arith.constant 0 : index
    %c0_8 = arith.constant 0 : index
    %29 = vector.load %arg3[%c0_6, %c0_7, %c0_8] : memref<1x1x2xf32, #tpu.memory_space<vmem>>, vector<1x1x2xf32>
    tpu.vector_store %arg3[%c0_6, %c0_7, %c0_8], %28 {strides = array<i32>} : memref<1x1x2xf32, #tpu.memory_space<vmem>>, vector<1x1x2xf32>,
    return
  }
  func.func @transform_0(%arg0: i32) -> (i32, i32) {
    %c0_i32 = arith.constant 0 : i32
    %c0_i32_0 = arith.constant 0 : i32
    return %arg0, %c0_i32 : i32, i32
  }
  func.func @transform_1(%arg0: i32) -> (i32, i32) {
    %c0_i32 = arith.constant 0 : i32
    %c0_i32_0 = arith.constant 0 : i32
    return %arg0, %c0_i32 : i32, i32
  }
  func.func @transform_2(%arg0: i32) -> (i32, i32, i32) {
    %c0_i32 = arith.constant 0 : i32
    %c0_i32_0 = arith.constant 0 : i32
    %c0_i32_1 = arith.constant 0 : i32
    return %arg0, %c0_i32, %c0_i32_0 : i32, i32, i32
  }
}

</mosaic_0001>

<llo_original>
// kernel: mlm_accuracy.1
$region0: #{mlm_accuracy.1}
  #allocation0 [shape = 'u32[]', space=smem, size = 0x4, offset = 0x4, fixed_abs, tag = 'smem constant byte address 0x4 - core index']
  #allocation1 [shape = 'u32[72,128]{1,0:T(1,128)}', space=vmem, size = 0x9000, scoped, tag = 'internal scratch']
  %s0 = inlined_call_operand.vmem [shape: f32[16,32], index: 0, kind: input, shape index: {}]
  %s1 = inlined_call_operand.vmem [shape: f32[16,2], index: 1, kind: input, shape index: {}]
  %s2 = inlined_call_operand.vmem [shape: f32[2,1,2], index: 2, kind: output, shape index: {}]
  %s3 = sld [smem:[#allocation0]]
  $region41: #{mlm_accuracy.1} parent=0
    _
  %s5 = ssub.s32 1, %s3
  %s6 = scalar_select 0, %s5, %s3
  loop: start=0, step=1, limit=4
  $region2: #{mlm_accuracy.1} parent=0 // loop_pre_header
    _
  $region3: #{mlm_accuracy.1} parent=0 // loop_header
    %s8 = sphi 0, %s12
    %p9 = scmp.ge.s32.totalorder %s8, 4
    %s18 = sphi 0, %s20
    %s21 = sphi 0, %s18
    %s22 = sphi 0, %s21
    %s38 = sphi 0, %s22
    %s44 = sphi 0, %s46
    %s47 = sphi 0, %s44
    %s48 = sphi 0, %s47
    %s64 = sphi 0, %s48
    %s70 = sphi 0, %s72
    %s73 = sphi 0, %s70
    %s74 = sphi 0, %s73
    %s90 = sphi 0, %s74
  $region4: #{mlm_accuracy.1} parent=0 // loop_header_branch
    %11 = sbr.rel (%p9) target = $region8
  $region5: #{mlm_accuracy.1} parent=0 // loop_body
    %s13 = ssub.s32 %s8, 1
    %s14 = ssub.s32 %s8, 2
    %s15 = sadd.s32 %s8, 1
    %s16 = ssub.s32 %s8, %s15
    %p17 = scmp.eq.s32.totalorder %s16, 0
    %s19 = sadd.s32 %s18, 1
    %s20 = scalar_select %p17, %s18, %s19
    %p23 = pneg %p17
    %p24 = scmp.eq.s32.totalorder %s8, 1
    %p25 = por %p23, %p24
    %p26 = scmp.ne.s32.totalorder %s18, %s21
    %p27 = scmp.eq.s32.totalorder %s8, 0
    %p28 = por %p26, %p27
    %p29 = scmp.ne.s32.totalorder %s18, %s21
    %p30 = scmp.eq.s32.totalorder %s13, 1
    %p31 = por %p29, %p30
    %p32 = scmp.ne.s32.totalorder %s21, %s22
    %p33 = scmp.eq.s32.totalorder %s13, 0
    %p34 = por %p32, %p33
    %p35 = scmp.ne.s32.totalorder %s21, %s22
    %p36 = scmp.eq.s32.totalorder %s14, 1
    %p37 = por %p35, %p36
    %p39 = scmp.ne.s32.totalorder %s22, %s38
    %p40 = scmp.eq.s32.totalorder %s14, 0
    %p41 = por %p39, %p40
    %s42 = ssub.s32 %s8, %s15
    %p43 = scmp.eq.s32.totalorder %s42, 0
    %s45 = sadd.s32 %s44, 1
    %s46 = scalar_select %p43, %s44, %s45
    %p49 = pneg %p43
    %p50 = scmp.eq.s32.totalorder %s8, 1
    %p51 = por %p49, %p50
    %p52 = scmp.ne.s32.totalorder %s44, %s47
    %p53 = scmp.eq.s32.totalorder %s8, 0
    %p54 = por %p52, %p53
    %p55 = scmp.ne.s32.totalorder %s44, %s47
    %p56 = scmp.eq.s32.totalorder %s13, 1
    %p57 = por %p55, %p56
    %p58 = scmp.ne.s32.totalorder %s47, %s48
    %p59 = scmp.eq.s32.totalorder %s13, 0
    %p60 = por %p58, %p59
    %p61 = scmp.ne.s32.totalorder %s47, %s48
    %p62 = scmp.eq.s32.totalorder %s14, 1
    %p63 = por %p61, %p62
    %p65 = scmp.ne.s32.totalorder %s48, %s64
    %p66 = scmp.eq.s32.totalorder %s14, 0
    %p67 = por %p65, %p66
    %s68 = ssub.s32 %s8, %s15
    %p69 = scmp.eq.s32.totalorder %s68, 0
    %s71 = sadd.s32 %s70, 1
    %s72 = scalar_select %p69, %s70, %s71
    %p75 = pneg %p69
    %p76 = scmp.eq.s32.totalorder %s8, 1
    %p77 = por %p75, %p76
    %p78 = scmp.ne.s32.totalorder %s70, %s73
    %p79 = scmp.eq.s32.totalorder %s8, 0
    %p80 = por %p78, %p79
    %p81 = scmp.ne.s32.totalorder %s70, %s73
    %p82 = scmp.eq.s32.totalorder %s13, 1
    %p83 = por %p81, %p82
    %p84 = scmp.ne.s32.totalorder %s73, %s74
    %p85 = scmp.eq.s32.totalorder %s13, 0
    %p86 = por %p84, %p85
    %p87 = scmp.ne.s32.totalorder %s73, %s74
    %p88 = scmp.eq.s32.totalorder %s14, 1
    %p89 = por %p87, %p88
    %p91 = scmp.ne.s32.totalorder %s74, %s90
    %p92 = scmp.eq.s32.totalorder %s14, 0
    %p93 = por %p91, %p92
    %p94 = scmp.le.s32.totalorder 1, %s8
    %p95 = scmp.lt.s32.totalorder %s8, 3
    %p96 = pnand %p94, %p95
    %p97 = pneg %p96
    // Predicated region
    $region9: #{mlm_accuracy.1} parent=5 // pred_check
      _
    $region10: #{mlm_accuracy.1} parent=5 // pred_check_branch
      %99 = sbr.rel (%p96) target = $region12
    $region11: #{mlm_accuracy.1} parent=5 // pred_region
      %s100 = ssub.s32 %s8, 1
    $region12: #{mlm_accuracy.1} parent=5 // pred_fallthru
      _
    %p101 = scmp.lt.s32.totalorder %s8, 2
    // Predicated region
    $region13: #{mlm_accuracy.1} parent=5 // pred_check
      %p102 = pneg %p101
    $region14: #{mlm_accuracy.1} parent=5 // pred_check_branch
      %104 = sbr.rel (%p102) target = $region16
    $region15: #{mlm_accuracy.1} parent=5 // pred_region
      // Predicated region
      $region17: #{mlm_accuracy.1} parent=15 // pred_check
        %p105 = pneg %p28
      $region18: #{mlm_accuracy.1} parent=15 // pred_check_branch
        %107 = sbr.rel (%p105) target = $region20
      $region19: #{mlm_accuracy.1} parent=15 // pred_region
        %p108 = scmp.lt.s32.totalorder %s8, 1
        %s109 = scalar_select %p108, %s8, 1
        %s110 = smul.addr %s109, 8
        %s111 = scalar_lea.vmem %s0, %s110
      $region20: #{mlm_accuracy.1} parent=15 // pred_fallthru
        _
      // Predicated region
      $region21: #{mlm_accuracy.1} parent=15 // pred_check
        %p112 = pneg %p54
      $region22: #{mlm_accuracy.1} parent=15 // pred_check_branch
        %114 = sbr.rel (%p112) target = $region24
      $region23: #{mlm_accuracy.1} parent=15 // pred_region
        %p115 = scmp.lt.s32.totalorder %s8, 1
        %s116 = scalar_select %p115, %s8, 1
        %s117 = smul.addr %s116, 8
        %s118 = scalar_lea.vmem %s1, %s117
      $region24: #{mlm_accuracy.1} parent=15 // pred_fallthru
        _
    $region16: #{mlm_accuracy.1} parent=5 // pred_fallthru
      _
    %p119 = scmp.le.s32.totalorder 1, %s8
    %p120 = scmp.lt.s32.totalorder %s8, 3
    %p121 = pnand %p119, %p120
    %p122 = pneg %p121
    // Predicated region
    $region25: #{mlm_accuracy.1} parent=5 // pred_check
      _
    $region26: #{mlm_accuracy.1} parent=5 // pred_check_branch
      %124 = sbr.rel (%p121) target = $region28
    $region27: #{mlm_accuracy.1} parent=5 // pred_region
      %s125 = ssub.s32 %s8, 1
      %p126 = scmp.lt.s32.totalorder %s13, 1
      %s127 = scalar_select %p126, %s13, 1
      %s128 = smul.addr %s127, 8
      %s129 = scalar_lea.vmem %s0, %s128
      %p130 = pneg %p34
      %p131 = pneg %p31
      %p132 = scmp.lt.s32.totalorder %s13, 1
      %s133 = scalar_select %p132, %s13, 1
      %s134 = smul.addr %s133, 8
      %s135 = scalar_lea.vmem %s1, %s134
      %p136 = pneg %p60
      %p137 = pneg %p57
      %p138 = pneg %p86
      %p139 = pneg %p83
      %p140 = scmp.lt.s32.totalorder %s13, 1
      %s141 = scalar_select %p140, %s13, 1
      %s142 = scalar_lea.vmem %s2, %s141
      %p143 = scmp.lt.s32.totalorder %s13, 1
      %s144 = scalar_select %p143, %s13, 1
      %s145 = smul.addr %s144, 8
      %s146 = scalar_lea.vmem %s0, %s145
      %p147 = scmp.lt.s32.totalorder %s13, 1
      %s148 = scalar_select %p147, %s13, 1
      %s149 = smul.addr %s148, 8
      %s150 = scalar_lea.vmem %s1, %s149
      %p151 = scmp.lt.s32.totalorder %s13, 1
      %s152 = scalar_select %p151, %s13, 1
      %s153 = scalar_lea.vmem %s2, %s152
      %v154 = vld [vmem:[%s146] sm:$0xff]
      %v155 = vld [vmem:[%s150] sm:$0xff]
      %s156 = smul.u32 %s13, 8
      %v157 = vlaneseq
      %v158 = vshrl.u32 %v157, 7
      %v159 = vstv %s156
      %v160 = vadd.s32 %v159, %v158
      %vm161 = vcmp.lt.s32.totalorder %v160, 16
      %v162 = vsel %vm161, %v155, 0.0
      %vm163 = vcmask 261120
      %v164 = vsel %vm163, %v154, -inf
      %165 = vmax.index.xlane.f32.xlu0 %v164
      %v166 = vpop.xlane.xlu0 %165
      %v167 = vcvt.s32.f32 %v166
      %vm168 = vcmp.eq.f32.partialorder %v167, %v155
      %v169 = vsel %vm168, 1, 0
      %v170 = vcvt.s32.f32 %v169
      %172 = vrot.lane.b32.xlu0 %v170, 1
      %v173 = vpop.permute.xlu0 %172
      %v175 = vmul.f32 %v162, %v173
      %vm176 = vcmask 15368
      %v177 = vsel %vm176, %v175, 0.0
      %v178 = vrot.slane %v177, 4
      %v179 = vadd.f32 %v177, %v178
      %v180 = vrot.slane %v179, 2
      %v181 = vadd.f32 %v179, %v180
      %v182 = vrot.slane %v181, 1
      %v183 = vadd.f32 %v181, %v182
      %vm184 = vcmp.gt.f32.partialorder %v162, 0.0
      %v185 = vsel %vm184, 1, 0
      %v186 = vcvt.s32.f32 %v185
      %v187 = vsel %vm176, %v186, 0.0
      %v188 = vrot.slane %v187, 4
      %v189 = vadd.f32 %v187, %v188
      %v190 = vrot.slane %v189, 2
      %v191 = vadd.f32 %v189, %v190
      %v192 = vrot.slane %v191, 1
      %v193 = vadd.f32 %v191, %v192
      %195 = vrot.lane.b32.xlu0 %v183, 127
      %v196 = vpop.permute.xlu0 %195
      %vm198 = vcmask 7168
      %v199 = vsel %vm198, %v196, %v193
      %vm200 = vcmask 8192
      %201 = vst.msk [vmem:[%s153] sm:$0x1] %vm200, %v199
      %p202 = scmp.lt.s32.totalorder %s13, 1
      %s203 = scalar_select %p202, %s13, 1
      %s204 = scalar_lea.vmem %s2, %s203
      // Predicated region
      $region29: #{mlm_accuracy.1} parent=27 // pred_check
        %p205 = pneg %p83
      $region30: #{mlm_accuracy.1} parent=27 // pred_check_branch
        %207 = sbr.rel (%p205) target = $region32
      $region31: #{mlm_accuracy.1} parent=27 // pred_region
        _
      $region32: #{mlm_accuracy.1} parent=27 // pred_fallthru
        _
    $region28: #{mlm_accuracy.1} parent=5 // pred_fallthru
      _
    %p208 = scmp.le.s32.totalorder 2, %s8
    // Predicated region
    $region33: #{mlm_accuracy.1} parent=5 // pred_check
      %p209 = pneg %p208
    $region34: #{mlm_accuracy.1} parent=5 // pred_check_branch
      %211 = sbr.rel (%p209) target = $region36
    $region35: #{mlm_accuracy.1} parent=5 // pred_region
      %s212 = ssub.s32 %s8, 2
      // Predicated region
      $region37: #{mlm_accuracy.1} parent=35 // pred_check
        %p213 = pneg %p89
      $region38: #{mlm_accuracy.1} parent=35 // pred_check_branch
        %215 = sbr.rel (%p213) target = $region40
      $region39: #{mlm_accuracy.1} parent=35 // pred_region
        %p216 = scmp.lt.s32.totalorder %s14, 1
        %s217 = scalar_select %p216, %s14, 1
        %s218 = scalar_lea.vmem %s2, %s217
      $region40: #{mlm_accuracy.1} parent=35 // pred_fallthru
        _
    $region36: #{mlm_accuracy.1} parent=5 // pred_fallthru
      _
  $region6: #{mlm_accuracy.1} parent=0 // loop_footer
    %s12 = sadd.s32 1, %s8
  $region7: #{mlm_accuracy.1} parent=0 // loop_footer_branch
    %7 = sbr.rel target = $region3
  $region8: #{mlm_accuracy.1} parent=0 // loop_exit
    _

</llo_original>
